<compile_context>
chip_gen: v7x
topology: tpu7x:2x2x1
jax: 0.10.0
libtpu: 0.0.40
codegen_flags: <defaults>
</compile_context>

<pallas_src>
import jax
import jax.numpy as jnp
from jax.experimental import pallas as pl
from jax.experimental.pallas import tpu as pltpu


def _round_up(x, m):
    return ((x + m - 1) // m) * m


def _choose_tile_and_vmem(n, out_row_bytes, requested_tile, *, row_align=8,
                          extra_row_bytes=0, min_steps_large=8):
    """Pick a row tile and a scoped-VMEM limit for a row-tiled kernel.

    out_row_bytes: bytes per row of the lane-padded output block.
    extra_row_bytes: per-row headroom for in-kernel temporaries.
    """
    n_rounded = _round_up(max(int(n), 1), row_align)
    tile = min(int(requested_tile), n_rounded)
    # v7x has 2 TensorCores; "parallel" grid axes are sharded across them, so
    # make sure large problems produce at least `min_steps_large` grid steps.
    if n_rounded >= min_steps_large * 1024:
        tile = min(tile, _round_up(pl.cdiv(n_rounded, min_steps_large), row_align))
    tile = max(row_align, _round_up(tile, row_align))

    def footprint(t):
        dist_block = t * 128 * 4        # (t, 1) f32 block pads its lane dim to 128
        out_block = t * out_row_bytes   # lane-padded output block
        return 2 * (dist_block + out_block) + t * extra_row_bytes + (4 << 20)

    # Keep the double-buffered working set within a budget that is safe even
    # on v7x's 64 MiB physical VMEM.
    budget = 40 << 20
    while footprint(tile) > budget and tile > row_align:
        tile = max(row_align, _round_up(tile // 2, row_align))

    vmem_limit = int(min(56 << 20, max(footprint(tile) + (8 << 20), 16 << 20)))
    return tile, vmem_limit


# -----------------------------------------------------------------------------
# Standalone kernel: out[n, g] = exp(coeff * (dist[n] - mu[g])^2)
# -----------------------------------------------------------------------------
def _gaussian_smearing_kernel(coeff_ref, dist_ref, mu_ref, out_ref):
    # coeff_ref: (1,) f32 SMEM; dist_ref: (TILE_N, 1); mu_ref: (1, G);
    # out_ref: (TILE_N, G)
    coeff = coeff_ref[0]
    d = dist_ref[...]                          # (TILE_N, 1) f32
    mu = mu_ref[...]                           # (1, G)     f32
    diff = d - mu                              # broadcast -> (TILE_N, G)
    # exp is the only EUP op; the sub/two muls co-issue on the VPU for free.
    out_ref[...] = jnp.exp(coeff * diff * diff).astype(out_ref.dtype)


def gaussian_smearing(dist, mu, coeff, *, tile_n=8192, out_dtype=jnp.float32):
    """dist: arbitrary-shaped float array; returns (dist.size, num_gaussians)."""
    dist_flat = dist.reshape(-1).astype(jnp.float32)
    n = dist_flat.shape[0]
    g = mu.shape[0]

    out_itemsize = jnp.dtype(out_dtype).itemsize
    row_align = 8 * max(1, 4 // out_itemsize)          # 8 for f32, 16 for bf16
    out_row_bytes = _round_up(g, 128) * out_itemsize
    tile_n, vmem_limit = _choose_tile_and_vmem(
        n, out_row_bytes, tile_n, row_align=row_align,
        extra_row_bytes=128 * 4)                       # diff/exp temporaries

    dist_2d = dist_flat.reshape(n, 1)
    mu_2d = mu.astype(jnp.float32).reshape(1, g)
    coeff_arr = jnp.asarray(coeff, dtype=jnp.float32).reshape(1)

    grid = (pl.cdiv(n, tile_n),)

    cost = pl.CostEstimate(
        flops=3 * n * g,
        transcendentals=n * g,
        bytes_accessed=n * 4 + g * 4 + n * g * out_itemsize,
    )

    return pl.pallas_call(
        _gaussian_smearing_kernel,
        out_shape=jax.ShapeDtypeStruct((n, g), out_dtype),
        grid=grid,
        in_specs=[
            pl.BlockSpec(memory_space=pltpu.MemorySpace.SMEM),   # coeff scalar
            pl.BlockSpec((tile_n, 1), lambda i: (i, 0)),         # dist rows
            pl.BlockSpec((1, g), lambda i: (0, 0)),              # mu (constant block)
        ],
        out_specs=pl.BlockSpec((tile_n, g), lambda i: (i, 0)),
        compiler_params=pltpu.CompilerParams(
            dimension_semantics=("parallel",),
            vmem_limit_bytes=vmem_limit,
        ),
        cost_estimate=cost,
    )(coeff_arr, dist_2d, mu_2d)


# -----------------------------------------------------------------------------
# Fused kernel: GaussianSmearing followed by Linear(num_gaussians, H).
# The (N, G) smearing never touches HBM; the stored (N, H) output is
# lane-dense when H is a multiple of 128.
# -----------------------------------------------------------------------------
def _gaussian_smearing_linear_kernel(coeff_ref, dist_ref, mu_ref, w_ref, b_ref,
                                     out_ref):
    coeff = coeff_ref[0]
    d = dist_ref[...]                          # (TILE_N, 1)
    mu = mu_ref[...]                           # (1, G)
    diff = d - mu
    smear = jnp.exp(coeff * diff * diff)       # (TILE_N, G) f32, stays in VMEM
    acc = jnp.dot(smear, w_ref[...], preferred_element_type=jnp.float32)
    acc = acc + b_ref[...]
    out_ref[...] = acc.astype(out_ref.dtype)


def gaussian_smearing_linear(dist, mu, coeff, w, b=None, *, tile_n=4096,
                             out_dtype=jnp.float32):
    """Fused exp(coeff*(dist[:,None]-mu[None,:])**2) @ w + b  ->  (N, H)."""
    dist_flat = dist.reshape(-1).astype(jnp.float32)
    n = dist_flat.shape[0]
    g = mu.shape[0]
    assert w.shape[0] == g, (w.shape, g)
    h = w.shape[1]
    if b is None:
        b = jnp.zeros((h,), jnp.float32)

    out_itemsize = jnp.dtype(out_dtype).itemsize
    row_align = 8 * max(1, 4 // out_itemsize)
    out_row_bytes = _round_up(h, 128) * out_itemsize
    tile_n, vmem_limit = _choose_tile_and_vmem(
        n, out_row_bytes, tile_n, row_align=row_align,
        extra_row_bytes=2 * 128 * 4 + _round_up(h, 128) * 4)   # smear + f32 acc

    dist_2d = dist_flat.reshape(n, 1)
    mu_2d = mu.astype(jnp.float32).reshape(1, g)
    w_2d = w.astype(jnp.float32).reshape(g, h)
    b_2d = b.astype(jnp.float32).reshape(1, h)
    coeff_arr = jnp.asarray(coeff, dtype=jnp.float32).reshape(1)

    grid = (pl.cdiv(n, tile_n),)

    cost = pl.CostEstimate(
        flops=3 * n * g + 2 * n * g * h + n * h,
        transcendentals=n * g,
        bytes_accessed=n * 4 + g * 4 + g * h * 4 + h * 4 + n * h * out_itemsize,
    )

    return pl.pallas_call(
        _gaussian_smearing_linear_kernel,
        out_shape=jax.ShapeDtypeStruct((n, h), out_dtype),
        grid=grid,
        in_specs=[
            pl.BlockSpec(memory_space=pltpu.MemorySpace.SMEM),   # coeff scalar
            pl.BlockSpec((tile_n, 1), lambda i: (i, 0)),         # dist rows
            pl.BlockSpec((1, g), lambda i: (0, 0)),              # mu   (constant)
            pl.BlockSpec((g, h), lambda i: (0, 0)),              # W    (constant)
            pl.BlockSpec((1, h), lambda i: (0, 0)),              # bias (constant)
        ],
        out_specs=pl.BlockSpec((tile_n, h), lambda i: (i, 0)),
        compiler_params=pltpu.CompilerParams(
            dimension_semantics=("parallel",),
            vmem_limit_bytes=vmem_limit,
        ),
        cost_estimate=cost,
    )(coeff_arr, dist_2d, mu_2d, w_2d, b_2d)


def make_gaussian_smearing_params(start=0.0, stop=5.0, num_gaussians=50):
    """Deterministic parameter setup matching the PyTorch __init__."""
    mu = jnp.linspace(start, stop, num_gaussians, dtype=jnp.float32)
    spacing = (float(stop) - float(start)) / (num_gaussians - 1)  # no device sync
    coeff = -0.5 / spacing ** 2
    return mu, coeff


def gaussian_smearing_reference(dist, mu, coeff):
    d = dist.reshape(-1, 1).astype(jnp.float32) - mu.reshape(1, -1)
    return jnp.exp(coeff * d * d)


if __name__ == "__main__":
    key = jax.random.PRNGKey(0)
    k1, k2, k3, k4 = jax.random.split(key, 4)

    mu, coeff = make_gaussian_smearing_params(start=0.0, stop=5.0, num_gaussians=50)

    # Case 1: small evenly-shaped input (256 distances in [0, 5)), single step.
    dist = jax.random.uniform(k1, (256,), dtype=jnp.float32, minval=0.0, maxval=5.0)
    out = jax.block_until_ready(gaussian_smearing(dist, mu, coeff))
    ref = gaussian_smearing_reference(dist, mu, coeff)
    assert out.shape == (256, 50), out.shape
    assert jnp.allclose(out, ref, atol=1e-6, rtol=1e-6), "mismatch vs reference (even)"

    # Case 2: ragged N with a multi-step grid (exercises the masked last block).
    dist_r = jax.random.uniform(k2, (300,), dtype=jnp.float32, minval=0.0, maxval=5.0)
    out_r = jax.block_until_ready(gaussian_smearing(dist_r, mu, coeff, tile_n=128))
    ref_r = gaussian_smearing_reference(dist_r, mu, coeff)
    assert out_r.shape == (300, 50), out_r.shape
    assert jnp.allclose(out_r, ref_r, atol=1e-6, rtol=1e-6), \
        "mismatch vs reference (ragged)"

    # Case 3: bf16 stores (math stays f32, cast on store) — looser tolerance.
    out_bf = jax.block_until_ready(
        gaussian_smearing(dist_r, mu, coeff, tile_n=128, out_dtype=jnp.bfloat16))
    assert out_bf.dtype == jnp.bfloat16
    assert jnp.allclose(out_bf.astype(jnp.float32), ref_r, atol=2e-2, rtol=2e-2), \
        "mismatch vs reference (bf16)"

    # Case 4: fused GaussianSmearing -> Linear(50, 128), lane-dense output.
    H = 128
    w = jax.random.normal(k3, (50, H), dtype=jnp.float32) * 0.1
    b = jax.random.normal(k4, (H,), dtype=jnp.float32) * 0.1
    out_f = jax.block_until_ready(
        gaussian_smearing_linear(dist_r, mu, coeff, w, b, tile_n=128))
    ref_f = ref_r @ w + b
    assert out_f.shape == (300, H), out_f.shape
    assert jnp.allclose(out_f, ref_f, atol=1e-2, rtol=1e-2), \
        "mismatch vs reference (fused linear)"

    print("KERNEL_OK")
</pallas_src>

<mosaic_0001>
module attributes {stable_mosaic.version = 11 : i64} {
  func.func @_gaussian_smearing_kernel(%arg0: i32, %arg1: memref<1xf32, #tpu.memory_space<smem>>, %arg2: memref<256x1xf32, #tpu.memory_space<vmem>>, %arg3: memref<1x50xf32, #tpu.memory_space<vmem>>, %arg4: memref<256x50xf32, #tpu.memory_space<vmem>>) attributes {dimension_semantics = [#tpu.dimension_semantics<parallel>], iteration_bounds = array<i64: 1>, scalar_prefetch = 0 : i64, scratch_operands = 0 : i64, tpu.core_type = #tpu.core_type<tc>, window_params = [{transform_indices = @transform_0, window_bounds = array<i64: 1>}, {transform_indices = @transform_1, window_bounds = array<i64: 256, 1>}, {pipeline_mode = #tpu.pipeline_mode<synchronous>, transform_indices = @transform_2, window_bounds = array<i64: 1, 50>}, {transform_indices = @transform_3, window_bounds = array<i64: 256, 50>}]} {
    %c0 = arith.constant 0 : index
    %0 = memref.load %arg1[%c0] : memref<1xf32, #tpu.memory_space<smem>>
    %c0_0 = arith.constant 0 : index
    %c0_1 = arith.constant 0 : index
    %1 = vector.load %arg2[%c0_0, %c0_1] : memref<256x1xf32, #tpu.memory_space<vmem>>, vector<256x1xf32>
    %c0_2 = arith.constant 0 : index
    %c0_3 = arith.constant 0 : index
    %2 = vector.load %arg3[%c0_2, %c0_3] : memref<1x50xf32, #tpu.memory_space<vmem>>, vector<1x50xf32>
    %3 = vector.broadcast %1 : vector<256x1xf32> to vector<256x50xf32>
    %4 = vector.broadcast %2 : vector<1x50xf32> to vector<256x50xf32>
    %5 = arith.subf %3, %4 : vector<256x50xf32>
    %6 = vector.broadcast %0 : f32 to vector<256x50xf32>
    %7 = arith.mulf %6, %5 : vector<256x50xf32>
    %8 = arith.mulf %7, %5 : vector<256x50xf32>
    %9 = math.exp %8 : vector<256x50xf32>
    %c0_4 = arith.constant 0 : index
    %c0_5 = arith.constant 0 : index
    %10 = vector.load %arg4[%c0_4, %c0_5] : memref<256x50xf32, #tpu.memory_space<vmem>>, vector<256x50xf32>
    tpu.vector_store %arg4[%c0_4, %c0_5], %9 {strides = array<i32>} : memref<256x50xf32, #tpu.memory_space<vmem>>, vector<256x50xf32>,
    return
  }
  func.func @transform_0(%arg0: i32) -> i32 {
    %c0_i32 = arith.constant 0 : i32
    %c0_i32_0 = arith.constant 0 : i32
    return %c0_i32 : i32
  }
  func.func @transform_1(%arg0: i32) -> (i32, i32) {
    %c0_i32 = arith.constant 0 : i32
    %c0_i32_0 = arith.constant 0 : i32
    return %arg0, %c0_i32 : i32, i32
  }
  func.func @transform_2(%arg0: i32) -> (i32, i32) {
    %c0_i32 = arith.constant 0 : i32
    %c0_i32_0 = arith.constant 0 : i32
    %c0_i32_1 = arith.constant 0 : i32
    return %c0_i32, %c0_i32_0 : i32, i32
  }
  func.func @transform_3(%arg0: i32) -> (i32, i32) {
    %c0_i32 = arith.constant 0 : i32
    %c0_i32_0 = arith.constant 0 : i32
    return %arg0, %c0_i32 : i32, i32
  }
}

</mosaic_0001>

<llo_original>
// kernel: tpu_custom_call.1
$region0: #{tpu_custom_call.1}
  #allocation0 [shape = 'u32[]', space=smem, size = 0x4, offset = 0x4, fixed_abs, tag = 'smem constant byte address 0x4 - core index']
  #allocation1 [shape = 'u32[144,128]{1,0:T(1,128)}', space=vmem, size = 0x12000, scoped, tag = 'internal scratch']
  #allocation2 [shape = 'f32[1]{0:T(128)S(6)}', space=smem, size = 0x200, scoped, tag = 'scoped memory for tpu_custom_call.1']
  %s0 = inlined_call_operand.<no memory space> [shape: f32[1], index: 0, kind: input, shape index: {}]
  %s1 = inlined_call_operand.vmem [shape: f32[256,1], index: 1, kind: input, shape index: {}]
  %s2 = inlined_call_operand.vmem [shape: f32[1,50], index: 2, kind: input, shape index: {}]
  %s3 = inlined_call_operand.vmem [shape: f32[256,50], index: 3, kind: output, shape index: {}]
  %s4 = sld [smem:[#allocation0]]
  $region22: #{tpu_custom_call.1} parent=0
    _
  %s6 = ssub.s32 1, %s4
  %s7 = scalar_select 0, %s6, %s4
  %8 = sst [smem:[#allocation2]] %s0
  // Predicated region
  $region2: #{tpu_custom_call.1} parent=0 // pred_check
    _
  $region3: #{tpu_custom_call.1} parent=0 // pred_check_branch
    %10 = sbr.rel (0) target = $region5
  $region4: #{tpu_custom_call.1} parent=0 // pred_region
    _
  $region5: #{tpu_custom_call.1} parent=0 // pred_fallthru
    _
  // Predicated region
  $region6: #{tpu_custom_call.1} parent=0 // pred_check
    _
  $region7: #{tpu_custom_call.1} parent=0 // pred_check_branch
    %12 = sbr.rel (0) target = $region9
  $region8: #{tpu_custom_call.1} parent=0 // pred_region
    _
  $region9: #{tpu_custom_call.1} parent=0 // pred_fallthru
    _
  // Predicated region
  $region10: #{tpu_custom_call.1} parent=0 // pred_check
    _
  $region11: #{tpu_custom_call.1} parent=0 // pred_check_branch
    %14 = sbr.rel (0) target = $region13
  $region12: #{tpu_custom_call.1} parent=0 // pred_region
    _
  $region13: #{tpu_custom_call.1} parent=0 // pred_fallthru
    _
  %s15 = sld [smem:[#allocation2]]
  %v16 = vld [vmem:[%s1] sm:$0xff]
  %v17 = vld [vmem:[%s1 + $0x8] sm:$0xff]
  %v18 = vld [vmem:[%s1 + $0x10] sm:$0xff]
  %v19 = vld [vmem:[%s1 + $0x18] sm:$0xff]
  %v20 = vld [vmem:[%s1 + $0x20] sm:$0xff]
  %v21 = vld [vmem:[%s1 + $0x28] sm:$0xff]
  %v22 = vld [vmem:[%s1 + $0x30] sm:$0xff]
  %v23 = vld [vmem:[%s1 + $0x38] sm:$0xff]
  %v24 = vld [vmem:[%s1 + $0x40] sm:$0xff]
  %v25 = vld [vmem:[%s1 + $0x48] sm:$0xff]
  %v26 = vld [vmem:[%s1 + $0x50] sm:$0xff]
  %v27 = vld [vmem:[%s1 + $0x58] sm:$0xff]
  %v28 = vld [vmem:[%s1 + $0x60] sm:$0xff]
  %v29 = vld [vmem:[%s1 + $0x68] sm:$0xff]
  %v30 = vld [vmem:[%s1 + $0x70] sm:$0xff]
  %v31 = vld [vmem:[%s1 + $0x78] sm:$0xff]
  %v32 = vld [vmem:[%s1 + $0x80] sm:$0xff]
  %v33 = vld [vmem:[%s1 + $0x88] sm:$0xff]
  %v34 = vld [vmem:[%s1 + $0x90] sm:$0xff]
  %v35 = vld [vmem:[%s1 + $0x98] sm:$0xff]
  %v36 = vld [vmem:[%s1 + $0xa0] sm:$0xff]
  %v37 = vld [vmem:[%s1 + $0xa8] sm:$0xff]
  %v38 = vld [vmem:[%s1 + $0xb0] sm:$0xff]
  %v39 = vld [vmem:[%s1 + $0xb8] sm:$0xff]
  %v40 = vld [vmem:[%s1 + $0xc0] sm:$0xff]
  %v41 = vld [vmem:[%s1 + $0xc8] sm:$0xff]
  %v42 = vld [vmem:[%s1 + $0xd0] sm:$0xff]
  %v43 = vld [vmem:[%s1 + $0xd8] sm:$0xff]
  %v44 = vld [vmem:[%s1 + $0xe0] sm:$0xff]
  %v45 = vld [vmem:[%s1 + $0xe8] sm:$0xff]
  %v46 = vld [vmem:[%s1 + $0xf0] sm:$0xff]
  %v47 = vld [vmem:[%s1 + $0xf8] sm:$0xff]
  %v48 = vld [vmem:[%s2] sm:$0x1]
  %50 = vset.pattern.permute.xlu0 0
  %51 = vperm.xlu0 %50, %v16
  %v52 = vpop.permute.xlu0 %51
  %55 = vset.pattern.permute.xlu0 0
  %56 = vperm.xlu0 %55, %v17
  %v57 = vpop.permute.xlu0 %56
  %60 = vset.pattern.permute.xlu0 0
  %61 = vperm.xlu0 %60, %v18
  %v62 = vpop.permute.xlu0 %61
  %65 = vset.pattern.permute.xlu0 0
  %66 = vperm.xlu0 %65, %v19
  %v67 = vpop.permute.xlu0 %66
  %70 = vset.pattern.permute.xlu0 0
  %71 = vperm.xlu0 %70, %v20
  %v72 = vpop.permute.xlu0 %71
  %75 = vset.pattern.permute.xlu0 0
  %76 = vperm.xlu0 %75, %v21
  %v77 = vpop.permute.xlu0 %76
  %80 = vset.pattern.permute.xlu0 0
  %81 = vperm.xlu0 %80, %v22
  %v82 = vpop.permute.xlu0 %81
  %85 = vset.pattern.permute.xlu0 0
  %86 = vperm.xlu0 %85, %v23
  %v87 = vpop.permute.xlu0 %86
  %90 = vset.pattern.permute.xlu0 0
  %91 = vperm.xlu0 %90, %v24
  %v92 = vpop.permute.xlu0 %91
  %95 = vset.pattern.permute.xlu0 0
  %96 = vperm.xlu0 %95, %v25
  %v97 = vpop.permute.xlu0 %96
  %100 = vset.pattern.permute.xlu0 0
  %101 = vperm.xlu0 %100, %v26
  %v102 = vpop.permute.xlu0 %101
  %105 = vset.pattern.permute.xlu0 0
  %106 = vperm.xlu0 %105, %v27
  %v107 = vpop.permute.xlu0 %106
  %110 = vset.pattern.permute.xlu0 0
  %111 = vperm.xlu0 %110, %v28
  %v112 = vpop.permute.xlu0 %111
  %115 = vset.pattern.permute.xlu0 0
  %116 = vperm.xlu0 %115, %v29
  %v117 = vpop.permute.xlu0 %116
  %120 = vset.pattern.permute.xlu0 0
  %121 = vperm.xlu0 %120, %v30
  %v122 = vpop.permute.xlu0 %121
  %125 = vset.pattern.permute.xlu0 0
  %126 = vperm.xlu0 %125, %v31
  %v127 = vpop.permute.xlu0 %126
  %130 = vset.pattern.permute.xlu0 0
  %131 = vperm.xlu0 %130, %v32
  %v132 = vpop.permute.xlu0 %131
  %135 = vset.pattern.permute.xlu0 0
  %136 = vperm.xlu0 %135, %v33
  %v137 = vpop.permute.xlu0 %136
  %140 = vset.pattern.permute.xlu0 0
  %141 = vperm.xlu0 %140, %v34
  %v142 = vpop.permute.xlu0 %141
  %145 = vset.pattern.permute.xlu0 0
  %146 = vperm.xlu0 %145, %v35
  %v147 = vpop.permute.xlu0 %146
  %150 = vset.pattern.permute.xlu0 0
  %151 = vperm.xlu0 %150, %v36
  %v152 = vpop.permute.xlu0 %151
  %155 = vset.pattern.permute.xlu0 0
  %156 = vperm.xlu0 %155, %v37
  %v157 = vpop.permute.xlu0 %156
  %160 = vset.pattern.permute.xlu0 0
  %161 = vperm.xlu0 %160, %v38
  %v162 = vpop.permute.xlu0 %161
  %165 = vset.pattern.permute.xlu0 0
  %166 = vperm.xlu0 %165, %v39
  %v167 = vpop.permute.xlu0 %166
  %170 = vset.pattern.permute.xlu0 0
  %171 = vperm.xlu0 %170, %v40
  %v172 = vpop.permute.xlu0 %171
  %175 = vset.pattern.permute.xlu0 0
  %176 = vperm.xlu0 %175, %v41
  %v177 = vpop.permute.xlu0 %176
  %180 = vset.pattern.permute.xlu0 0
  %181 = vperm.xlu0 %180, %v42
  %v182 = vpop.permute.xlu0 %181
  %185 = vset.pattern.permute.xlu0 0
  %186 = vperm.xlu0 %185, %v43
  %v187 = vpop.permute.xlu0 %186
  %190 = vset.pattern.permute.xlu0 0
  %191 = vperm.xlu0 %190, %v44
  %v192 = vpop.permute.xlu0 %191
  %195 = vset.pattern.permute.xlu0 0
  %196 = vperm.xlu0 %195, %v45
  %v197 = vpop.permute.xlu0 %196
  %200 = vset.pattern.permute.xlu0 0
  %201 = vperm.xlu0 %200, %v46
  %v202 = vpop.permute.xlu0 %201
  %205 = vset.pattern.permute.xlu0 0
  %206 = vperm.xlu0 %205, %v47
  %v207 = vpop.permute.xlu0 %206
  %v210 = vlaneseq
  %v211 = vshrl.u32 %v210, 7
  %v212 = vsub.s32 0, %v211
  %v213 = vrot.slane %v48, %v212
  %v215 = vsub.f32 %v52, %v213
  %v216 = vsub.f32 %v57, %v213
  %v217 = vsub.f32 %v62, %v213
  %v218 = vsub.f32 %v67, %v213
  %v219 = vsub.f32 %v72, %v213
  %v220 = vsub.f32 %v77, %v213
  %v221 = vsub.f32 %v82, %v213
  %v222 = vsub.f32 %v87, %v213
  %v223 = vsub.f32 %v92, %v213
  %v224 = vsub.f32 %v97, %v213
  %v225 = vsub.f32 %v102, %v213
  %v226 = vsub.f32 %v107, %v213
  %v227 = vsub.f32 %v112, %v213
  %v228 = vsub.f32 %v117, %v213
  %v229 = vsub.f32 %v122, %v213
  %v230 = vsub.f32 %v127, %v213
  %v231 = vsub.f32 %v132, %v213
  %v232 = vsub.f32 %v137, %v213
  %v233 = vsub.f32 %v142, %v213
  %v234 = vsub.f32 %v147, %v213
  %v235 = vsub.f32 %v152, %v213
  %v236 = vsub.f32 %v157, %v213
  %v237 = vsub.f32 %v162, %v213
  %v238 = vsub.f32 %v167, %v213
  %v239 = vsub.f32 %v172, %v213
  %v240 = vsub.f32 %v177, %v213
  %v241 = vsub.f32 %v182, %v213
  %v242 = vsub.f32 %v187, %v213
  %v243 = vsub.f32 %v192, %v213
  %v244 = vsub.f32 %v197, %v213
  %v245 = vsub.f32 %v202, %v213
  %v246 = vsub.f32 %v207, %v213
  %v247 = vstv %s15
  %v248 = vmul.f32 %v247, %v215
  %v249 = vmul.f32 %v247, %v216
  %v250 = vmul.f32 %v247, %v217
  %v251 = vmul.f32 %v247, %v218
  %v252 = vmul.f32 %v247, %v219
  %v253 = vmul.f32 %v247, %v220
  %v254 = vmul.f32 %v247, %v221
  %v255 = vmul.f32 %v247, %v222
  %v256 = vmul.f32 %v247, %v223
  %v257 = vmul.f32 %v247, %v224
  %v258 = vmul.f32 %v247, %v225
  %v259 = vmul.f32 %v247, %v226
  %v260 = vmul.f32 %v247, %v227
  %v261 = vmul.f32 %v247, %v228
  %v262 = vmul.f32 %v247, %v229
  %v263 = vmul.f32 %v247, %v230
  %v264 = vmul.f32 %v247, %v231
  %v265 = vmul.f32 %v247, %v232
  %v266 = vmul.f32 %v247, %v233
  %v267 = vmul.f32 %v247, %v234
  %v268 = vmul.f32 %v247, %v235
  %v269 = vmul.f32 %v247, %v236
  %v270 = vmul.f32 %v247, %v237
  %v271 = vmul.f32 %v247, %v238
  %v272 = vmul.f32 %v247, %v239
  %v273 = vmul.f32 %v247, %v240
  %v274 = vmul.f32 %v247, %v241
  %v275 = vmul.f32 %v247, %v242
  %v276 = vmul.f32 %v247, %v243
  %v277 = vmul.f32 %v247, %v244
  %v278 = vmul.f32 %v247, %v245
  %v279 = vmul.f32 %v247, %v246
  %v280 = vmul.f32 %v248, %v215
  %v281 = vmul.f32 %v249, %v216
  %v282 = vmul.f32 %v250, %v217
  %v283 = vmul.f32 %v251, %v218
  %v284 = vmul.f32 %v252, %v219
  %v285 = vmul.f32 %v253, %v220
  %v286 = vmul.f32 %v254, %v221
  %v287 = vmul.f32 %v255, %v222
  %v288 = vmul.f32 %v256, %v223
  %v289 = vmul.f32 %v257, %v224
  %v290 = vmul.f32 %v258, %v225
  %v291 = vmul.f32 %v259, %v226
  %v292 = vmul.f32 %v260, %v227
  %v293 = vmul.f32 %v261, %v228
  %v294 = vmul.f32 %v262, %v229
  %v295 = vmul.f32 %v263, %v230
  %v296 = vmul.f32 %v264, %v231
  %v297 = vmul.f32 %v265, %v232
  %v298 = vmul.f32 %v266, %v233
  %v299 = vmul.f32 %v267, %v234
  %v300 = vmul.f32 %v268, %v235
  %v301 = vmul.f32 %v269, %v236
  %v302 = vmul.f32 %v270, %v237
  %v303 = vmul.f32 %v271, %v238
  %v304 = vmul.f32 %v272, %v239
  %v305 = vmul.f32 %v273, %v240
  %v306 = vmul.f32 %v274, %v241
  %v307 = vmul.f32 %v275, %v242
  %v308 = vmul.f32 %v276, %v243
  %v309 = vmul.f32 %v277, %v244
  %v310 = vmul.f32 %v278, %v245
  %v311 = vmul.f32 %v279, %v246
  %v312 = vmul.f32 %v280, 1.442695
  %v313 = vpow.pop %v312
  %v314 = vmul.f32 %v281, 1.442695
  %v315 = vpow.pop %v314
  %v316 = vmul.f32 %v282, 1.442695
  %v317 = vpow.pop %v316
  %v318 = vmul.f32 %v283, 1.442695
  %v319 = vpow.pop %v318
  %v320 = vmul.f32 %v284, 1.442695
  %v321 = vpow.pop %v320
  %v322 = vmul.f32 %v285, 1.442695
  %v323 = vpow.pop %v322
  %v324 = vmul.f32 %v286, 1.442695
  %v325 = vpow.pop %v324
  %v326 = vmul.f32 %v287, 1.442695
  %v327 = vpow.pop %v326
  %v328 = vmul.f32 %v288, 1.442695
  %v329 = vpow.pop %v328
  %v330 = vmul.f32 %v289, 1.442695
  %v331 = vpow.pop %v330
  %v332 = vmul.f32 %v290, 1.442695
  %v333 = vpow.pop %v332
  %v334 = vmul.f32 %v291, 1.442695
  %v335 = vpow.pop %v334
  %v336 = vmul.f32 %v292, 1.442695
  %v337 = vpow.pop %v336
  %v338 = vmul.f32 %v293, 1.442695
  %v339 = vpow.pop %v338
  %v340 = vmul.f32 %v294, 1.442695
  %v341 = vpow.pop %v340
  %v342 = vmul.f32 %v295, 1.442695
  %v343 = vpow.pop %v342
  %v344 = vmul.f32 %v296, 1.442695
  %v345 = vpow.pop %v344
  %v346 = vmul.f32 %v297, 1.442695
  %v347 = vpow.pop %v346
  %v348 = vmul.f32 %v298, 1.442695
  %v349 = vpow.pop %v348
  %v350 = vmul.f32 %v299, 1.442695
  %v351 = vpow.pop %v350
  %v352 = vmul.f32 %v300, 1.442695
  %v353 = vpow.pop %v352
  %v354 = vmul.f32 %v301, 1.442695
  %v355 = vpow.pop %v354
  %v356 = vmul.f32 %v302, 1.442695
  %v357 = vpow.pop %v356
  %v358 = vmul.f32 %v303, 1.442695
  %v359 = vpow.pop %v358
  %v360 = vmul.f32 %v304, 1.442695
  %v361 = vpow.pop %v360
  %v362 = vmul.f32 %v305, 1.442695
  %v363 = vpow.pop %v362
  %v364 = vmul.f32 %v306, 1.442695
  %v365 = vpow.pop %v364
  %v366 = vmul.f32 %v307, 1.442695
  %v367 = vpow.pop %v366
  %v368 = vmul.f32 %v308, 1.442695
  %v369 = vpow.pop %v368
  %v370 = vmul.f32 %v309, 1.442695
  %v371 = vpow.pop %v370
  %v372 = vmul.f32 %v310, 1.442695
  %v373 = vpow.pop %v372
  %v374 = vmul.f32 %v311, 1.442695
  %v375 = vpow.pop %v374
  %vm376 = vcmask 408576
  %377 = vst.msk [vmem:[%s3] sm:$0xff] %vm376, %v313
  %378 = vst.msk [vmem:[%s3 + $0x8] sm:$0xff] %vm376, %v315
  %379 = vst.msk [vmem:[%s3 + $0x10] sm:$0xff] %vm376, %v317
  %380 = vst.msk [vmem:[%s3 + $0x18] sm:$0xff] %vm376, %v319
  %381 = vst.msk [vmem:[%s3 + $0x20] sm:$0xff] %vm376, %v321
  %382 = vst.msk [vmem:[%s3 + $0x28] sm:$0xff] %vm376, %v323
  %383 = vst.msk [vmem:[%s3 + $0x30] sm:$0xff] %vm376, %v325
  %384 = vst.msk [vmem:[%s3 + $0x38] sm:$0xff] %vm376, %v327
  %385 = vst.msk [vmem:[%s3 + $0x40] sm:$0xff] %vm376, %v329
  %386 = vst.msk [vmem:[%s3 + $0x48] sm:$0xff] %vm376, %v331
  %387 = vst.msk [vmem:[%s3 + $0x50] sm:$0xff] %vm376, %v333
  %388 = vst.msk [vmem:[%s3 + $0x58] sm:$0xff] %vm376, %v335
  %389 = vst.msk [vmem:[%s3 + $0x60] sm:$0xff] %vm376, %v337
  %390 = vst.msk [vmem:[%s3 + $0x68] sm:$0xff] %vm376, %v339
  %391 = vst.msk [vmem:[%s3 + $0x70] sm:$0xff] %vm376, %v341
  %392 = vst.msk [vmem:[%s3 + $0x78] sm:$0xff] %vm376, %v343
  %393 = vst.msk [vmem:[%s3 + $0x80] sm:$0xff] %vm376, %v345
  %394 = vst.msk [vmem:[%s3 + $0x88] sm:$0xff] %vm376, %v347
  %395 = vst.msk [vmem:[%s3 + $0x90] sm:$0xff] %vm376, %v349
  %396 = vst.msk [vmem:[%s3 + $0x98] sm:$0xff] %vm376, %v351
  %397 = vst.msk [vmem:[%s3 + $0xa0] sm:$0xff] %vm376, %v353
  %398 = vst.msk [vmem:[%s3 + $0xa8] sm:$0xff] %vm376, %v355
  %399 = vst.msk [vmem:[%s3 + $0xb0] sm:$0xff] %vm376, %v357
  %400 = vst.msk [vmem:[%s3 + $0xb8] sm:$0xff] %vm376, %v359
  %401 = vst.msk [vmem:[%s3 + $0xc0] sm:$0xff] %vm376, %v361
  %402 = vst.msk [vmem:[%s3 + $0xc8] sm:$0xff] %vm376, %v363
  %403 = vst.msk [vmem:[%s3 + $0xd0] sm:$0xff] %vm376, %v365
  %404 = vst.msk [vmem:[%s3 + $0xd8] sm:$0xff] %vm376, %v367
  %405 = vst.msk [vmem:[%s3 + $0xe0] sm:$0xff] %vm376, %v369
  %406 = vst.msk [vmem:[%s3 + $0xe8] sm:$0xff] %vm376, %v371
  %407 = vst.msk [vmem:[%s3 + $0xf0] sm:$0xff] %vm376, %v373
  %408 = vst.msk [vmem:[%s3 + $0xf8] sm:$0xff] %vm376, %v375
  // Predicated region
  $region14: #{tpu_custom_call.1} parent=0 // pred_check
    _
  $region15: #{tpu_custom_call.1} parent=0 // pred_check_branch
    %410 = sbr.rel (0) target = $region17
  $region16: #{tpu_custom_call.1} parent=0 // pred_region
    _
  $region17: #{tpu_custom_call.1} parent=0 // pred_fallthru
    _
  // Predicated region
  $region18: #{tpu_custom_call.1} parent=0 // pred_check
    _
  $region19: #{tpu_custom_call.1} parent=0 // pred_check_branch
    %412 = sbr.rel (0) target = $region21
  $region20: #{tpu_custom_call.1} parent=0 // pred_region
    _
  $region21: #{tpu_custom_call.1} parent=0 // pred_fallthru
    _

</llo_original>
